<compile_context>
chip_gen: v6e
topology: v6e:2x2x1
jax: 0.10.0
libtpu: 0.0.40
codegen_flags: <defaults>
</compile_context>

<pallas_src>
import jax
import jax.numpy as jnp
from jax.experimental import pallas as pl
from jax.experimental.pallas import tpu as pltpu

DIM_INPUT = 2
DIM_HIDDEN = 16
DIM_OUTPUT = 4

_SLAB_ROWS = 24   # 16 rows (layer 1) + 4 rows (folded layer 2∘3), padded to a multiple of 8
_SLAB_COLS = 128  # one lane tile


def _mlp_kernel(p_ref, x_ref, o_ref):
    """One batch tile. x_ref: [DIM_INPUT, TB], o_ref: [DIM_OUTPUT, TB] (batch on lanes).

    p_ref is a single (8,128)-aligned parameter slab, resident across the grid:
      rows  0:16, cols 0:2   -> W1  [DIM_HIDDEN, DIM_INPUT]
      rows  0:16, col  2     -> b1  [DIM_HIDDEN]
      rows 16:20, cols 0:16  -> W23 [DIM_OUTPUT, DIM_HIDDEN]   (= W3 @ W2)
      rows 16:20, col  16    -> b23 [DIM_OUTPUT]               (= W3 @ b2 + b3)
    """
    x = x_ref[...]                                                   # [2, TB]
    w1 = p_ref[0:DIM_HIDDEN, 0:DIM_INPUT]                            # [16, 2]
    b1 = p_ref[0:DIM_HIDDEN, DIM_INPUT:DIM_INPUT + 1]                # [16, 1]
    w23 = p_ref[DIM_HIDDEN:DIM_HIDDEN + DIM_OUTPUT, 0:DIM_HIDDEN]    # [4, 16]
    b23 = p_ref[DIM_HIDDEN:DIM_HIDDEN + DIM_OUTPUT,
                DIM_HIDDEN:DIM_HIDDEN + 1]                           # [4, 1]

    # in_to_hidden + ReLU: K == 2, so two VPU broadcast-FMAs beat an MXU push/pop.
    h = w1[:, 0:1] * x[0:1, :] + w1[:, 1:2] * x[1:2, :] + b1         # [16, TB]
    h = jnp.maximum(h, 0.0)

    # Folded (hidden_to_hidden ∘ hidden_to_out): one lane-dense MXU matmul.
    o = jnp.dot(w23, h, preferred_element_type=jnp.float32) + b23    # [4, TB]
    o_ref[...] = o.astype(o_ref.dtype)


def _round_up(n, m):
    return ((n + m - 1) // m) * m


def _pack_params(params):
    """Fold the two bias-only linears and pack everything into one aligned slab."""
    w1, b1 = params["in_to_hidden"]        # [16, 2], [16]   (torch convention: [out, in])
    w2, b2 = params["hidden_to_hidden"]    # [16, 16], [16]
    w3, b3 = params["hidden_to_out"]       # [4, 16], [4]
    w23 = w3 @ w2                          # [4, 16]
    b23 = w3 @ b2 + b3                     # [4]
    slab = jnp.zeros((_SLAB_ROWS, _SLAB_COLS), jnp.float32)
    slab = slab.at[0:DIM_HIDDEN, 0:DIM_INPUT].set(w1.astype(jnp.float32))
    slab = slab.at[0:DIM_HIDDEN, DIM_INPUT].set(b1.astype(jnp.float32))
    slab = slab.at[DIM_HIDDEN:DIM_HIDDEN + DIM_OUTPUT, 0:DIM_HIDDEN].set(
        w23.astype(jnp.float32))
    slab = slab.at[DIM_HIDDEN:DIM_HIDDEN + DIM_OUTPUT, DIM_HIDDEN].set(
        b23.astype(jnp.float32))
    return slab


def neural_network_forward(x, params, *, block_batch=512, force_pallas=False):
    """Forward pass of NeuralNetwork. x: [B, DIM_INPUT] -> [B, DIM_OUTPUT] float32."""
    B = x.shape[0]

    # A pallas_call is pure dispatch/DMA overhead for DQN-sized micro-batches;
    # let XLA fuse those directly.
    if B < 128 and not force_pallas:
        return _reference_forward(x, params)

    slab = _pack_params(params)

    tb = min(block_batch, _round_up(B, 128))   # lane-dense batch tile (multiple of 128)
    b_pad = _round_up(B, tb)

    # Batch on the lane (last) axis: activations are [features, batch], zero-padded.
    xt = jnp.zeros((DIM_INPUT, b_pad), jnp.float32).at[:, :B].set(
        x.T.astype(jnp.float32))

    out_t = pl.pallas_call(
        _mlp_kernel,
        out_shape=jax.ShapeDtypeStruct((DIM_OUTPUT, b_pad), jnp.float32),
        grid=(b_pad // tb,),
        in_specs=[
            pl.BlockSpec((_SLAB_ROWS, _SLAB_COLS), lambda i: (0, 0)),  # resident params
            pl.BlockSpec((DIM_INPUT, tb), lambda i: (0, i)),           # batch tile of x
        ],
        out_specs=pl.BlockSpec((DIM_OUTPUT, tb), lambda i: (0, i)),
        compiler_params=pltpu.CompilerParams(
            dimension_semantics=("parallel",),   # shard batch tiles over v7x's 2 TCs
            vmem_limit_bytes=16 << 20,           # tiny footprint; safe on 64 MiB v7x VMEM
        ),
    )(slab, xt)

    return out_t[:, :B].T


def _init_linear(key, fan_in, fan_out):
    """torch.nn.Linear-style init: W [out, in], b [out], uniform(+/- 1/sqrt(fan_in))."""
    kw, kb = jax.random.split(key)
    bound = 1.0 / jnp.sqrt(jnp.float32(fan_in))
    w = jax.random.uniform(kw, (fan_out, fan_in), jnp.float32, -bound, bound)
    b = jax.random.uniform(kb, (fan_out,), jnp.float32, -bound, bound)
    return w, b


def init_params(key):
    k1, k2, k3 = jax.random.split(key, 3)
    return {
        "in_to_hidden": _init_linear(k1, DIM_INPUT, DIM_HIDDEN),
        "hidden_to_hidden": _init_linear(k2, DIM_HIDDEN, DIM_HIDDEN),
        "hidden_to_out": _init_linear(k3, DIM_HIDDEN, DIM_OUTPUT),
    }


def _reference_forward(x, params):
    """Pure-jnp equivalent of the torch forward (unfolded 3-layer form)."""
    w1, b1 = params["in_to_hidden"]
    w2, b2 = params["hidden_to_hidden"]
    w3, b3 = params["hidden_to_out"]
    h = jnp.maximum(x @ w1.T + b1, 0.0)
    h = h @ w2.T + b2
    return h @ w3.T + b3


if __name__ == "__main__":
    key = jax.random.PRNGKey(0)
    kx, kp = jax.random.split(key)
    params = init_params(kp)

    # Small batch consistent with the module's BATCH_SIZE=64 replay batches.
    B = 64
    x = jax.random.normal(kx, (B, DIM_INPUT), jnp.float32)
    out = jax.block_until_ready(neural_network_forward(x, params, force_pallas=True))
    ref = _reference_forward(x, params)
    assert out.shape == (B, DIM_OUTPUT)
    assert jnp.allclose(out, ref, atol=1e-5, rtol=1e-5)

    # Larger batch: exercises the multi-tile batch grid and lane padding path.
    B2 = 1000
    x2 = jax.random.normal(kx, (B2, DIM_INPUT), jnp.float32)
    out2 = jax.block_until_ready(neural_network_forward(x2, params))
    ref2 = _reference_forward(x2, params)
    assert out2.shape == (B2, DIM_OUTPUT)
    assert jnp.allclose(out2, ref2, atol=1e-5, rtol=1e-5)

    print("KERNEL_OK")
</pallas_src>

<mosaic_0001>
module attributes {stable_mosaic.version = 11 : i64} {
  func.func @_mlp_kernel(%arg0: i32, %arg1: memref<24x128xf32, #tpu.memory_space<vmem>>, %arg2: memref<2x128xf32, #tpu.memory_space<vmem>>, %arg3: memref<4x128xf32, #tpu.memory_space<vmem>>) attributes {dimension_semantics = [#tpu.dimension_semantics<parallel>], iteration_bounds = array<i64: 1>, scalar_prefetch = 0 : i64, scratch_operands = 0 : i64, tpu.core_type = #tpu.core_type<tc>, window_params = [{pipeline_mode = #tpu.pipeline_mode<synchronous>, transform_indices = @transform_0, window_bounds = array<i64: 24, 128>}, {transform_indices = @transform_1, window_bounds = array<i64: 2, 128>}, {transform_indices = @transform_2, window_bounds = array<i64: 4, 128>}]} {
    %c0 = arith.constant 0 : index
    %c0_0 = arith.constant 0 : index
    %0 = vector.load %arg2[%c0, %c0_0] : memref<2x128xf32, #tpu.memory_space<vmem>>, vector<2x128xf32>
    %c0_1 = arith.constant 0 : index
    %c0_2 = arith.constant 0 : index
    %1 = vector.load %arg1[%c0_1, %c0_2] : memref<24x128xf32, #tpu.memory_space<vmem>>, vector<16x2xf32>
    %c0_3 = arith.constant 0 : index
    %c2 = arith.constant 2 : index
    %2 = vector.load %arg1[%c0_3, %c2] : memref<24x128xf32, #tpu.memory_space<vmem>>, vector<16x1xf32>
    %c16 = arith.constant 16 : index
    %c0_4 = arith.constant 0 : index
    %3 = vector.load %arg1[%c16, %c0_4] : memref<24x128xf32, #tpu.memory_space<vmem>>, vector<4x16xf32>
    %c16_5 = arith.constant 16 : index
    %c16_6 = arith.constant 16 : index
    %4 = vector.load %arg1[%c16_5, %c16_6] : memref<24x128xf32, #tpu.memory_space<vmem>>, vector<4x1xf32>
    %5 = vector.extract_strided_slice %1 {offsets = [0, 0], sizes = [16, 1], strides = [1, 1]} : vector<16x2xf32> to vector<16x1xf32>
    %6 = vector.extract_strided_slice %0 {offsets = [0, 0], sizes = [1, 128], strides = [1, 1]} : vector<2x128xf32> to vector<1x128xf32>
    %7 = vector.broadcast %5 : vector<16x1xf32> to vector<16x128xf32>
    %8 = vector.broadcast %6 : vector<1x128xf32> to vector<16x128xf32>
    %9 = arith.mulf %7, %8 : vector<16x128xf32>
    %10 = vector.extract_strided_slice %1 {offsets = [0, 1], sizes = [16, 1], strides = [1, 1]} : vector<16x2xf32> to vector<16x1xf32>
    %11 = vector.extract_strided_slice %0 {offsets = [1, 0], sizes = [1, 128], strides = [1, 1]} : vector<2x128xf32> to vector<1x128xf32>
    %12 = vector.broadcast %10 : vector<16x1xf32> to vector<16x128xf32>
    %13 = vector.broadcast %11 : vector<1x128xf32> to vector<16x128xf32>
    %14 = arith.mulf %12, %13 : vector<16x128xf32>
    %15 = arith.addf %9, %14 : vector<16x128xf32>
    %16 = vector.broadcast %2 : vector<16x1xf32> to vector<16x128xf32>
    %17 = arith.addf %15, %16 : vector<16x128xf32>
    %cst = arith.constant 0.000000e+00 : f32
    %18 = vector.broadcast %cst : f32 to vector<16x128xf32>
    %19 = arith.maximumf %17, %18 : vector<16x128xf32>
    %cst_7 = arith.constant dense<0.000000e+00> : vector<4x128xf32>
    %20 = tpu.matmul %3, %19, %cst_7 {dimension_numbers = #tpu.dot_dimension_numbers<[1], [0], [0], [1], [0, 0, 1, 1], [], []>} : vector<4x16xf32>, vector<16x128xf32>, vector<4x128xf32> -> vector<4x128xf32>
    %21 = vector.broadcast %4 : vector<4x1xf32> to vector<4x128xf32>
    %22 = arith.addf %20, %21 : vector<4x128xf32>
    %c0_8 = arith.constant 0 : index
    %c0_9 = arith.constant 0 : index
    %23 = vector.load %arg3[%c0_8, %c0_9] : memref<4x128xf32, #tpu.memory_space<vmem>>, vector<4x128xf32>
    tpu.vector_store %arg3[%c0_8, %c0_9], %22 {strides = array<i32>} : memref<4x128xf32, #tpu.memory_space<vmem>>, vector<4x128xf32>,
    return
  }
  func.func @transform_0(%arg0: i32) -> (i32, i32) {
    %c0_i32 = arith.constant 0 : i32
    %c0_i32_0 = arith.constant 0 : i32
    %c0_i32_1 = arith.constant 0 : i32
    return %c0_i32, %c0_i32_0 : i32, i32
  }
  func.func @transform_1(%arg0: i32) -> (i32, i32) {
    %c0_i32 = arith.constant 0 : i32
    %c0_i32_0 = arith.constant 0 : i32
    return %c0_i32, %arg0 : i32, i32
  }
  func.func @transform_2(%arg0: i32) -> (i32, i32) {
    %c0_i32 = arith.constant 0 : i32
    %c0_i32_0 = arith.constant 0 : i32
    return %c0_i32, %arg0 : i32, i32
  }
}

</mosaic_0001>

<llo_original>
// kernel: tpu_custom_call.1
$region0: #{tpu_custom_call.1}
  #allocation0 [shape = 'u32[]', space=smem, size = 0x4, offset = 0x4, fixed_abs, tag = 'smem constant byte address 0x4 - core index']
  #allocation1 [shape = 'u32[144,128]{1,0:T(1,128)}', space=vmem, size = 0x12000, scoped, tag = 'internal scratch']
  %s0 = inlined_call_operand.hbm [shape: f32[24,128], index: 0, kind: input, shape index: {}]
  %s1 = inlined_call_operand.hbm [shape: f32[2,128], index: 1, kind: input, shape index: {}]
  %s2 = inlined_call_operand.hbm [shape: f32[4,128], index: 2, kind: output, shape index: {}]
  %s3 = sld [smem:[#allocation0]]
  $region26: #{tpu_custom_call.1} parent=0
    _
  %s5 = ssub.s32 1, %s3
  %s6 = scalar_select 0, %s5, %s3
  $region1: #{tpu_custom_call.1} parent=0
    #allocation2 [shape = 'u8[12288]{0}', space=vmem, size = 0x3000, scoped, tag = 'input window, operand 0, single buffered']
    #allocation3 [shape = 's32[1]{0}', space=sflag, size = 0x4, scoped, tag = 'scoped memory for tpu_custom_call.1']
    #allocation4 [shape = 's32[1]{0}', space=sflag, size = 0x4, scoped, tag = 'scoped memory for tpu_custom_call.1']
    #allocation5 [shape = 'u8[1024]{0}', space=vmem, size = 0x400, scoped, tag = 'input window, operand 1, single buffered']
    #allocation6 [shape = 's32[1]{0}', space=sflag, size = 0x4, scoped, tag = 'scoped memory for tpu_custom_call.1']
    #allocation7 [shape = 'u8[2048]{0}', space=vmem, size = 0x800, scoped, tag = 'output window, operand 0, single buffered']
    %7 = vsyncpa [#allocation3], 0
    %8 = vsyncpa [#allocation6], 0
    %9 = vsyncpa [#allocation4], 0
    // Predicated region
    $region2: #{tpu_custom_call.1} parent=1 // pred_check
      _
    $region3: #{tpu_custom_call.1} parent=1 // pred_check_branch
      %11 = sbr.rel (0) target = $region5
    $region4: #{tpu_custom_call.1} parent=1 // pred_region
      %s13 = ssub.s32 384, 384
      %14 = vsyncadd [#allocation3], %s13
      %s15 = sshll.u32 [#allocation2], 4
      %s16 = int_to_ptr.vmem [resolvable:$true] %s15
      %21 = dma.hbm_to_vmem [thread:$0]  %s0, 384, %s16, [#allocation3], 128, 128, 8
    $region5: #{tpu_custom_call.1} parent=1 // pred_fallthru
      _
    // Predicated region
    $region6: #{tpu_custom_call.1} parent=1 // pred_check
      _
    $region7: #{tpu_custom_call.1} parent=1 // pred_check_branch
      %23 = sbr.rel (0) target = $region9
    $region8: #{tpu_custom_call.1} parent=1 // pred_region
      %s25 = ssub.s32 32, 32
      %26 = vsyncadd [#allocation6], %s25
      %s28 = sshll.u32 [#allocation5], 4
      %s29 = int_to_ptr.vmem [resolvable:$true] %s28
      %31 = dma.hbm_to_vmem [thread:$0]  %s1, 32, %s29, [#allocation6]
    $region9: #{tpu_custom_call.1} parent=1 // pred_fallthru
      _
    // Predicated region
    $region10: #{tpu_custom_call.1} parent=1 // pred_check
      _
    $region11: #{tpu_custom_call.1} parent=1 // pred_check_branch
      %33 = sbr.rel (0) target = $region13
    $region12: #{tpu_custom_call.1} parent=1 // pred_region
      %34 = dma.done [#allocation3], 384
    $region13: #{tpu_custom_call.1} parent=1 // pred_fallthru
      _
    // Predicated region
    $region14: #{tpu_custom_call.1} parent=1 // pred_check
      _
    $region15: #{tpu_custom_call.1} parent=1 // pred_check_branch
      %36 = sbr.rel (0) target = $region17
    $region16: #{tpu_custom_call.1} parent=1 // pred_region
      %37 = dma.done [#allocation6], 32
    $region17: #{tpu_custom_call.1} parent=1 // pred_fallthru
      _
    %v38 = vld [vmem:[#allocation5] sm:$0x3]
    %v39 = vld [vmem:[#allocation2] sm:$0xff]
    %v40 = vld [vmem:[#allocation2 + $0x8] sm:$0xff]
    %v41 = vld [vmem:[#allocation2 + $0x10] sm:$0xf]
    %43 = vset.pattern.permute.xlu0 0
    %44 = vperm.xlu0 %43, %v39
    %v45 = vpop.permute.xlu0 %44
    %48 = vset.pattern.permute.xlu0 0
    %49 = vperm.xlu0 %48, %v40
    %v50 = vpop.permute.xlu0 %49
    %v52 = vlaneseq
    %v53 = vshrl.u32 %v52, 7
    %v54 = vsub.s32 0, %v53
    %v55 = vrot.slane %v38, %v54
    %v56 = vmul.f32 %v45, %v55
    %v57 = vmul.f32 %v50, %v55
    %58 = vset.pattern.permute.xlu0 1
    %59 = vperm.xlu0 %58, %v39
    %v60 = vpop.permute.xlu0 %59
    %62 = vset.pattern.permute.xlu0 1
    %63 = vperm.xlu0 %62, %v40
    %v64 = vpop.permute.xlu0 %63
    %v66 = vlaneseq
    %v67 = vshrl.u32 %v66, 7
    %v68 = vsub.s32 1, %v67
    %v69 = vrot.slane %v38, %v68
    %v70 = vmul.f32 %v60, %v69
    %v71 = vmul.f32 %v64, %v69
    %v72 = vadd.f32 %v56, %v70
    %v73 = vadd.f32 %v57, %v71
    %74 = vset.pattern.permute.xlu0 2
    %75 = vperm.xlu0 %74, %v39
    %v76 = vpop.permute.xlu0 %75
    %78 = vset.pattern.permute.xlu0 2
    %79 = vperm.xlu0 %78, %v40
    %v80 = vpop.permute.xlu0 %79
    %v82 = vadd.f32 %v72, %v76
    %v83 = vadd.f32 %v73, %v80
    %v84 = vmax.f32 %v82, 0.0
    %v85 = vmax.f32 %v83, 0.0
    %87 = vset.pattern.permute.xlu0 16
    %88 = vperm.xlu0 %87, %v41
    %v89 = vpop.permute.xlu0 %88
    %vm91 = vcmask 130048
    %v92 = vsel %vm91, %v41, 0
    %94 = vmatprep.subr.mxu0 0.0
    %95 = vmatpush1.msra.mxu0 0.0
    %96 = vmatprep.subr.mxu0 0.0
    %97 = vmatpush1.msra.mxu0 0.0
    %98 = vmatprep.subr.mxu0 0.0
    %99 = vmatpush1.msra.mxu0 0.0
    %100 = vmatprep.subr.mxu0 0.0
    %101 = vmatpush1.msra.mxu0 0.0
    %102 = vmatprep.subr.mxu0 0.0
    %103 = vmatpush1.msra.mxu0 0.0
    %104 = vmatprep.subr.mxu0 0.0
    %105 = vmatpush1.msra.mxu0 0.0
    %106 = vmatprep.subr.mxu0 0.0
    %107 = vmatpush1.msra.mxu0 0.0
    %108 = vmatprep.subr.mxu0 0.0
    %109 = vmatpush1.msra.mxu0 0.0
    %110 = vmatprep.subr.mxu0 0.0
    %111 = vmatpush1.msra.mxu0 0.0
    %112 = vmatprep.subr.mxu0 0.0
    %113 = vmatpush1.msra.mxu0 0.0
    %114 = vmatprep.subr.mxu0 0.0
    %115 = vmatpush1.msra.mxu0 0.0
    %116 = vmatprep.subr.mxu0 0.0
    %117 = vmatpush1.msra.mxu0 0.0
    %118 = vmatprep.subr.mxu0 0.0
    %119 = vmatpush1.msra.mxu0 0.0
    %120 = vmatprep.subr.mxu0 0.0
    %121 = vmatpush1.msra.mxu0 0.0
    %122 = vmatprep.subr.mxu0 0.0
    %123 = vmatpush1.msra.mxu0 %v85
    %124 = vmatprep.subr.mxu0 0.0
    %125 = vmatpush1.msra.mxu0 %v84
    %126 = vmatprep.subr.mxu0 0.0
    %127 = vmatpush2.msra.mxu0 0.0
    %128 = vmatprep.subr.mxu0 0.0
    %129 = vmatpush2.msra.mxu0 0.0
    %130 = vmatprep.subr.mxu0 0.0
    %131 = vmatpush2.msra.mxu0 0.0
    %132 = vmatprep.subr.mxu0 0.0
    %133 = vmatpush2.msra.mxu0 0.0
    %134 = vmatprep.subr.mxu0 0.0
    %135 = vmatpush2.msra.mxu0 0.0
    %136 = vmatprep.subr.mxu0 0.0
    %137 = vmatpush2.msra.mxu0 0.0
    %138 = vmatprep.subr.mxu0 0.0
    %139 = vmatpush2.msra.mxu0 0.0
    %140 = vmatprep.subr.mxu0 0.0
    %141 = vmatpush2.msra.mxu0 0.0
    %142 = vmatprep.subr.mxu0 0.0
    %143 = vmatpush2.msra.mxu0 0.0
    %144 = vmatprep.subr.mxu0 0.0
    %145 = vmatpush2.msra.mxu0 0.0
    %146 = vmatprep.subr.mxu0 0.0
    %147 = vmatpush2.msra.mxu0 0.0
    %148 = vmatprep.subr.mxu0 0.0
    %149 = vmatpush2.msra.mxu0 0.0
    %150 = vmatprep.subr.mxu0 0.0
    %151 = vmatpush2.msra.mxu0 0.0
    %152 = vmatprep.subr.mxu0 0.0
    %153 = vmatpush2.msra.mxu0 0.0
    %154 = vmatprep.subr.mxu0 0.0
    %155 = vmatpush2.msra.mxu0 0.0
    %156 = vmatprep.subr.mxu0 0.0
    %157 = vmatpush2.msra.mxu0 0.0
    %158 = vmatprep.mubr.f32.mxu0 0.0
    %159 = vmatmul.mubr.f32.gmra.mxu0 %v92
    %v160 = vpop.f32.mrf.mxu0
    %v161 = vadd.f32 %v89, %v160
    %v162 = vpop.f32.mrf.mxu0
    %163 = vdwg.mxu0
    %164 = vst [vmem:[#allocation7] sm:$0xf] %v161
    // Predicated region
    $region18: #{tpu_custom_call.1} parent=1 // pred_check
      _
    $region19: #{tpu_custom_call.1} parent=1 // pred_check_branch
      %166 = sbr.rel (0) target = $region21
    $region20: #{tpu_custom_call.1} parent=1 // pred_region
      %s168 = ssub.s32 64, 64
      %169 = vsyncadd [#allocation4], %s168
      %s171 = sshll.u32 [#allocation7], 4
      %s172 = int_to_ptr.vmem [resolvable:$true] %s171
      %174 = dma.vmem_to_hbm [thread:$0]  %s172, 64, %s2, [#allocation4]
    $region21: #{tpu_custom_call.1} parent=1 // pred_fallthru
      _
    // Predicated region
    $region22: #{tpu_custom_call.1} parent=1 // pred_check
      _
    $region23: #{tpu_custom_call.1} parent=1 // pred_check_branch
      %176 = sbr.rel (0) target = $region25
    $region24: #{tpu_custom_call.1} parent=1 // pred_region
      %177 = dma.done [#allocation4], 64
    $region25: #{tpu_custom_call.1} parent=1 // pred_fallthru
      _
    %178 = vsyncpa [#allocation3], 1
    %179 = vsyncpa [#allocation6], 1
    %180 = vsyncpa [#allocation4], 1

</llo_original>
